<compile_context>
chip_gen: v5e
topology: v5e:2x2
jax: 0.10.0
libtpu: 0.0.40
codegen_flags: <defaults>
</compile_context>

<pallas_src>
import numpy as np
import jax
import jax.numpy as jnp
from jax.experimental import pallas as pl
from jax.experimental.pallas import tpu as pltpu


# ----------------------------- Pallas kernels -------------------------------

def _upsample_kernel(a2_ref, y_ref, a2ct_ref, a1_ref, a1ct_ref, y2_ref, y1_ref):
    # Fused:  y2_tile = A2_tile @ y @ A2c^T   (bilinear x2)
    #         y1_tile = A1_tile @ y @ A1c^T   (nearest x2 ∘ bilinear x2, precomposed)
    # a2: (t2, Hy), a1: (t1, Hy), y: (1, Hy, Wy), a2ct: (Wy, W2), a1ct: (Wy, W1)
    yc = y_ref[0]                                                # (Hy, Wy) bf16
    t2 = jnp.dot(a2_ref[...], yc, preferred_element_type=jnp.float32)
    y2_ref[0] = jnp.dot(t2.astype(jnp.bfloat16), a2ct_ref[...],
                        preferred_element_type=jnp.float32)
    t1 = jnp.dot(a1_ref[...], yc, preferred_element_type=jnp.float32)
    y1_ref[0] = jnp.dot(t1.astype(jnp.bfloat16), a1ct_ref[...],
                        preferred_element_type=jnp.float32)


def fused_upsample(y_chw, a2_r, a2_cT, a1_r, a1_cT, *, tile1=256):
    """One pallas_call producing both y2 (bilinear x2) and y1 (nearest x2 of y2)."""
    C, Hy, Wy = y_chw.shape
    H2, W2 = a2_r.shape[0], a2_cT.shape[1]
    H1, W1 = a1_r.shape[0], a1_cT.shape[1]
    tile2 = tile1 // 2
    assert H1 % tile1 == 0 and H2 % tile2 == 0 and (H1 // tile1) == (H2 // tile2)
    n_row_tiles = H1 // tile1            # = 4 -> even split across v7x's 2 TCs

    yb = y_chw.astype(jnp.bfloat16)
    a2 = jnp.asarray(a2_r, jnp.bfloat16)
    a2ct = jnp.asarray(a2_cT, jnp.bfloat16)
    a1 = jnp.asarray(a1_r, jnp.bfloat16)
    a1ct = jnp.asarray(a1_cT, jnp.bfloat16)

    y2, y1 = pl.pallas_call(
        _upsample_kernel,
        out_shape=(jax.ShapeDtypeStruct((C, H2, W2), jnp.float32),
                   jax.ShapeDtypeStruct((C, H1, W1), jnp.float32)),
        grid=(n_row_tiles, C),           # row-tile axis leading (size 4)
        in_specs=[
            pl.BlockSpec((tile2, Hy), lambda r, c: (r, 0)),
            pl.BlockSpec((1, Hy, Wy), lambda r, c: (c, 0, 0)),
            pl.BlockSpec((Hy, W2), lambda r, c: (0, 0)),
            pl.BlockSpec((tile1, Hy), lambda r, c: (r, 0)),
            pl.BlockSpec((Hy, W1), lambda r, c: (0, 0)),
        ],
        out_specs=(pl.BlockSpec((1, tile2, W2), lambda r, c: (c, r, 0)),
                   pl.BlockSpec((1, tile1, W1), lambda r, c: (c, r, 0))),
        compiler_params=pltpu.CompilerParams(
            dimension_semantics=("parallel", "parallel"),
            vmem_limit_bytes=32 * 1024 * 1024),
    )(a2, yb, a2ct, a1, a1ct)
    return y2, y1


def _roi_kernel(x_ref, kT_ref, m_ref, ne_ref, roi1_ref, roi2_ref):
    # Fused RoIAlign (one small matmul against the kron'ed bilinear weights) and
    # RoIPool (masked max over static bin masks).
    # x: (C, HW), kT: (HW, P), m: (P, HW), ne: (1, P); outputs (C, P) each.
    x = x_ref[...]
    roi1_ref[...] = jnp.dot(x, kT_ref[...], preferred_element_type=jnp.float32)

    m = m_ref[...]
    neg = jnp.float32(np.finfo(np.float32).min)
    masked = jnp.where((m > 0.5)[None, :, :], x[:, None, :], neg)   # (C, P, HW)
    mx = jnp.max(masked, axis=-1)                                    # (C, P)
    roi2_ref[...] = jnp.where(ne_ref[...] > 0.5, mx, 0.0)


def roi_heads(x_flat, kT, mask, nonempty):
    C, HW = x_flat.shape
    P = mask.shape[0]
    return pl.pallas_call(
        _roi_kernel,
        out_shape=(jax.ShapeDtypeStruct((C, P), jnp.float32),
                   jax.ShapeDtypeStruct((C, P), jnp.float32)),
        grid=(1,),
        in_specs=[
            pl.BlockSpec((C, HW), lambda i: (0, 0)),
            pl.BlockSpec((HW, P), lambda i: (0, 0)),
            pl.BlockSpec((P, HW), lambda i: (0, 0)),
            pl.BlockSpec((1, P), lambda i: (0, 0)),
        ],
        out_specs=(pl.BlockSpec((C, P), lambda i: (0, 0)),
                   pl.BlockSpec((C, P), lambda i: (0, 0))),
    )(x_flat, kT, mask, nonempty)


# ------------------------ static weight/mask builders ------------------------

def _roi_align_matrices(H, W, roi, spatial_scale, pooled, sampling_ratio, aligned):
    # torchvision RoIAlign, separable form: roi1[c] = A_h @ x[c] @ A_w^T.
    _, x1, y1, x2, y2 = roi
    off = 0.5 if aligned else 0.0
    start_h = y1 * spatial_scale - off
    start_w = x1 * spatial_scale - off
    roi_h = y2 * spatial_scale - off - start_h
    roi_w = x2 * spatial_scale - off - start_w
    if not aligned:
        roi_h = max(roi_h, 1.0)
        roi_w = max(roi_w, 1.0)
    bin_h, bin_w = roi_h / pooled, roi_w / pooled
    grid_h = sampling_ratio if sampling_ratio > 0 else int(np.ceil(roi_h / pooled))
    grid_w = sampling_ratio if sampling_ratio > 0 else int(np.ceil(roi_w / pooled))

    def axis_matrix(start, bin_sz, grid, size):
        A = np.zeros((pooled, size), np.float32)
        for p in range(pooled):
            for i in range(grid):
                c = start + p * bin_sz + (i + 0.5) * bin_sz / grid
                if c < -1.0 or c > size:
                    continue
                c = max(c, 0.0)
                lo = int(c)
                if lo >= size - 1:
                    lo = size - 1
                    hi = size - 1
                    c = float(lo)
                else:
                    hi = lo + 1
                l = c - lo
                A[p, lo] += (1.0 - l) / grid
                A[p, hi] += l / grid
        return A

    A_h = axis_matrix(start_h, bin_h, grid_h, H)   # (pooled, H)
    A_w = axis_matrix(start_w, bin_w, grid_w, W)   # (pooled, W)
    return A_h, A_w


def _roi_pool_mask(H, W, roi, spatial_scale, pooled):
    # torchvision RoIPool bin membership masks over the flattened plane.
    _, x1, y1, x2, y2 = roi
    sw, sh = int(round(x1 * spatial_scale)), int(round(y1 * spatial_scale))
    ew, eh = int(round(x2 * spatial_scale)), int(round(y2 * spatial_scale))
    roi_w = max(ew - sw + 1, 1)
    roi_h = max(eh - sh + 1, 1)
    bin_w, bin_h = roi_w / pooled, roi_h / pooled
    M = np.zeros((pooled * pooled, H * W), np.float32)
    for ph in range(pooled):
        hs = min(max(int(np.floor(ph * bin_h)) + sh, 0), H)
        he = min(max(int(np.ceil((ph + 1) * bin_h)) + sh, 0), H)
        for pw in range(pooled):
            ws = min(max(int(np.floor(pw * bin_w)) + sw, 0), W)
            we = min(max(int(np.ceil((pw + 1) * bin_w)) + sw, 0), W)
            for h in range(hs, he):
                M[ph * pooled + pw, h * W + ws:h * W + we] = 1.0
    nonempty = (M.max(axis=-1, keepdims=True).T).astype(np.float32)  # (1, P)
    return M, nonempty


def _bilinear_upsample_matrix(in_size, out_size):
    # F.interpolate(mode='bilinear', align_corners=False), one axis.
    A = np.zeros((out_size, in_size), np.float32)
    scale = in_size / out_size
    for d in range(out_size):
        src = max((d + 0.5) * scale - 0.5, 0.0)
        lo = int(np.floor(src))
        hi = min(lo + 1, in_size - 1)
        l = src - lo
        A[d, lo] += 1.0 - l
        A[d, hi] += l
    return A


def _nearest_upsample_matrix(in_size, out_size):
    # F.interpolate(mode='nearest'), one axis.
    A = np.zeros((out_size, in_size), np.float32)
    for d in range(out_size):
        A[d, min(d * in_size // out_size, in_size - 1)] = 1.0
    return A


# --------------------------------- forward ----------------------------------

BOX = (0, 0.0, 0.0, 32.0, 32.0)   # torch.FloatTensor([[0, 0, 0, 32, 32]])


def model_forward(x):
    N, C, H, W = x.shape
    bidx = int(BOX[0])

    # ---- roi1 = RoIAlign(0.25, 7, -1, aligned=False); roi2 = RoIPool(0.5, 7) ----
    a_h, a_w = _roi_align_matrices(H, W, BOX, 0.25, 7, -1, False)     # (7,H), (7,W)
    K = np.kron(a_h, a_w)                                             # (49, H*W)
    mask, nonempty = _roi_pool_mask(H, W, BOX, 0.5, 7)
    x_flat = x[bidx].reshape(C, H * W)
    roi1_f, roi2_f = roi_heads(x_flat, jnp.asarray(K.T), jnp.asarray(mask),
                               jnp.asarray(nonempty))
    roi1 = roi1_f.reshape(1, C, 7, 7)
    roi2 = roi2_f.reshape(1, C, 7, 7)

    # (torch `kk` / `bb` constants are dead in the original forward — removed.)

    # ---- y2 = bilinear x2 of y = ones(1,3,256,256); y1 = nearest x2 of y2 ----
    Hy = Wy = 256
    y = jnp.ones((1, 3, Hy, Wy), jnp.float32)
    B_r = _bilinear_upsample_matrix(Hy, 2 * Hy)        # (512, 256)
    B_c = _bilinear_upsample_matrix(Wy, 2 * Wy)        # (512, 256)
    R_r = _nearest_upsample_matrix(2 * Hy, 4 * Hy)     # (1024, 512)
    R_c = _nearest_upsample_matrix(2 * Wy, 4 * Wy)     # (1024, 512)
    A1_r = R_r @ B_r                                   # precomposed nearest∘bilinear
    A1_c = R_c @ B_c
    y2_, y1_ = fused_upsample(y[0], B_r, B_c.T, A1_r, A1_c.T, tile1=256)
    y2 = y2_[None]                                     # (1, 3, 512, 512)
    y1 = y1_[None]                                     # (1, 3, 1024, 1024)

    # NOTE: the torch forward returns None; intermediates returned for checking.
    # TODO(synk): self.pool3 (MaxPool2d) / self.pool4 (AvgPool2d) are never used
    # in forward, so they are intentionally not implemented.
    return {"roi1": roi1, "roi2": roi2, "y2": y2, "y1": y1}


# ----------------------------------- main ------------------------------------

if __name__ == "__main__":
    key = jax.random.PRNGKey(0)
    x = jax.random.normal(key, (2, 4, 16, 16), jnp.float32)

    outs = jax.block_until_ready(model_forward(x))

    # sanity checks against numpy references
    xn = np.asarray(x)
    a_h, a_w = _roi_align_matrices(16, 16, BOX, 0.25, 7, -1, False)
    ref1 = np.einsum('ph,chw,qw->cpq', a_h, xn[0], a_w)
    assert np.allclose(np.asarray(outs["roi1"])[0], ref1, atol=1e-4), "RoIAlign mismatch"

    mask, ne = _roi_pool_mask(16, 16, BOX, 0.5, 7)
    xf = xn[0].reshape(4, 256)
    ref2 = np.where(mask[None] > 0.5, xf[:, None, :], -np.inf).max(-1)
    ref2 = np.where(ne > 0.5, ref2, 0.0)
    assert np.allclose(np.asarray(outs["roi2"]).reshape(4, 49), ref2, atol=1e-5), "RoIPool mismatch"

    assert outs["y2"].shape == (1, 3, 512, 512) and np.allclose(np.asarray(outs["y2"]), 1.0, atol=1e-5)
    assert outs["y1"].shape == (1, 3, 1024, 1024) and np.allclose(np.asarray(outs["y1"]), 1.0, atol=1e-5)

    print("KERNEL_OK")
</pallas_src>

<mosaic_0001>
module attributes {stable_mosaic.version = 11 : i64} {
  func.func @_roi_kernel(%arg0: i32, %arg1: memref<4x256xf32, #tpu.memory_space<vmem>>, %arg2: memref<256x49xf32, #tpu.memory_space<vmem>>, %arg3: memref<49x256xf32, #tpu.memory_space<vmem>>, %arg4: memref<1x49xf32, #tpu.memory_space<vmem>>, %arg5: memref<4x49xf32, #tpu.memory_space<vmem>>, %arg6: memref<4x49xf32, #tpu.memory_space<vmem>>) attributes {dimension_semantics = [#tpu.dimension_semantics<arbitrary>], iteration_bounds = array<i64: 1>, scalar_prefetch = 0 : i64, scratch_operands = 0 : i64, tpu.core_type = #tpu.core_type<tc>, window_params = [{pipeline_mode = #tpu.pipeline_mode<synchronous>, transform_indices = @transform_0, window_bounds = array<i64: 4, 256>}, {pipeline_mode = #tpu.pipeline_mode<synchronous>, transform_indices = @transform_1, window_bounds = array<i64: 256, 49>}, {pipeline_mode = #tpu.pipeline_mode<synchronous>, transform_indices = @transform_2, window_bounds = array<i64: 49, 256>}, {pipeline_mode = #tpu.pipeline_mode<synchronous>, transform_indices = @transform_3, window_bounds = array<i64: 1, 49>}, {pipeline_mode = #tpu.pipeline_mode<synchronous>, transform_indices = @transform_4, window_bounds = array<i64: 4, 49>}, {pipeline_mode = #tpu.pipeline_mode<synchronous>, transform_indices = @transform_5, window_bounds = array<i64: 4, 49>}]} {
    %c0 = arith.constant 0 : index
    %c0_0 = arith.constant 0 : index
    %0 = vector.load %arg1[%c0, %c0_0] : memref<4x256xf32, #tpu.memory_space<vmem>>, vector<4x256xf32>
    %c0_1 = arith.constant 0 : index
    %c0_2 = arith.constant 0 : index
    %1 = vector.load %arg2[%c0_1, %c0_2] : memref<256x49xf32, #tpu.memory_space<vmem>>, vector<256x49xf32>
    %cst = arith.constant dense<0.000000e+00> : vector<4x49xf32>
    %2 = tpu.matmul %0, %1, %cst {dimension_numbers = #tpu.dot_dimension_numbers<[1], [0], [0], [1], [0, 0, 1, 1], [], []>} : vector<4x256xf32>, vector<256x49xf32>, vector<4x49xf32> -> vector<4x49xf32>
    %c0_3 = arith.constant 0 : index
    %c0_4 = arith.constant 0 : index
    %3 = vector.load %arg5[%c0_3, %c0_4] : memref<4x49xf32, #tpu.memory_space<vmem>>, vector<4x49xf32>
    tpu.vector_store %arg5[%c0_3, %c0_4], %2 {strides = array<i32>} : memref<4x49xf32, #tpu.memory_space<vmem>>, vector<4x49xf32>,
    %c0_5 = arith.constant 0 : index
    %c0_6 = arith.constant 0 : index
    %4 = vector.load %arg3[%c0_5, %c0_6] : memref<49x256xf32, #tpu.memory_space<vmem>>, vector<49x256xf32>
    %cst_7 = arith.constant 5.000000e-01 : f32
    %5 = vector.broadcast %cst_7 : f32 to vector<49x256xf32>
    %6 = arith.cmpf ogt, %4, %5 : vector<49x256xf32>
    %7 = vector.shape_cast %6 : vector<49x256xi1> to vector<1x49x256xi1>
    %8 = vector.shape_cast %0 : vector<4x256xf32> to vector<4x1x256xf32>
    %cst_8 = arith.constant -3.40282347E+38 : f32
    %9 = vector.shape_cast %7 : vector<1x49x256xi1> to vector<1x49x256xi1>
    %10 = vector.broadcast %9 : vector<1x49x256xi1> to vector<4x49x256xi1>
    %11 = vector.shape_cast %8 : vector<4x1x256xf32> to vector<4x1x256xf32>
    %12 = vector.broadcast %11 : vector<4x1x256xf32> to vector<4x49x256xf32>
    %13 = vector.broadcast %cst_8 : f32 to vector<4x49x256xf32>
    %14 = arith.select %10, %12, %13 : vector<4x49x256xi1>, vector<4x49x256xf32>
    %cst_9 = arith.constant dense<0xFF800000> : vector<4x49xf32>
    %15 = vector.multi_reduction <maximumf>, %14, %cst_9 [2] : vector<4x49x256xf32> to vector<4x49xf32>
    %c0_10 = arith.constant 0 : index
    %c0_11 = arith.constant 0 : index
    %16 = vector.load %arg4[%c0_10, %c0_11] : memref<1x49xf32, #tpu.memory_space<vmem>>, vector<1x49xf32>
    %cst_12 = arith.constant 5.000000e-01 : f32
    %17 = vector.broadcast %cst_12 : f32 to vector<1x49xf32>
    %18 = arith.cmpf ogt, %16, %17 : vector<1x49xf32>
    %cst_13 = arith.constant 0.000000e+00 : f32
    %19 = vector.shape_cast %18 : vector<1x49xi1> to vector<1x49xi1>
    %20 = vector.broadcast %19 : vector<1x49xi1> to vector<4x49xi1>
    %21 = vector.broadcast %cst_13 : f32 to vector<4x49xf32>
    %22 = arith.select %20, %15, %21 : vector<4x49xi1>, vector<4x49xf32>
    %c0_14 = arith.constant 0 : index
    %c0_15 = arith.constant 0 : index
    %23 = vector.load %arg6[%c0_14, %c0_15] : memref<4x49xf32, #tpu.memory_space<vmem>>, vector<4x49xf32>
    tpu.vector_store %arg6[%c0_14, %c0_15], %22 {strides = array<i32>} : memref<4x49xf32, #tpu.memory_space<vmem>>, vector<4x49xf32>,
    return
  }
  func.func @transform_0(%arg0: i32) -> (i32, i32) {
    %c0_i32 = arith.constant 0 : i32
    %c0_i32_0 = arith.constant 0 : i32
    %c0_i32_1 = arith.constant 0 : i32
    return %c0_i32, %c0_i32_0 : i32, i32
  }
  func.func @transform_1(%arg0: i32) -> (i32, i32) {
    %c0_i32 = arith.constant 0 : i32
    %c0_i32_0 = arith.constant 0 : i32
    %c0_i32_1 = arith.constant 0 : i32
    return %c0_i32, %c0_i32_0 : i32, i32
  }
  func.func @transform_2(%arg0: i32) -> (i32, i32) {
    %c0_i32 = arith.constant 0 : i32
    %c0_i32_0 = arith.constant 0 : i32
    %c0_i32_1 = arith.constant 0 : i32
    return %c0_i32, %c0_i32_0 : i32, i32
  }
  func.func @transform_3(%arg0: i32) -> (i32, i32) {
    %c0_i32 = arith.constant 0 : i32
    %c0_i32_0 = arith.constant 0 : i32
    %c0_i32_1 = arith.constant 0 : i32
    return %c0_i32, %c0_i32_0 : i32, i32
  }
  func.func @transform_4(%arg0: i32) -> (i32, i32) {
    %c0_i32 = arith.constant 0 : i32
    %c0_i32_0 = arith.constant 0 : i32
    %c0_i32_1 = arith.constant 0 : i32
    return %c0_i32, %c0_i32_0 : i32, i32
  }
  func.func @transform_5(%arg0: i32) -> (i32, i32) {
    %c0_i32 = arith.constant 0 : i32
    %c0_i32_0 = arith.constant 0 : i32
    %c0_i32_1 = arith.constant 0 : i32
    return %c0_i32, %c0_i32_0 : i32, i32
  }
}

</mosaic_0001>

<llo_original>
// kernel: tpu_custom_call.1
$region0: #{tpu_custom_call.1}
  #allocation0 [shape = 'u32[]', space=smem, size = 0x4, offset = 0x4, fixed_abs, tag = 'smem constant byte address 0x4 - core index']
  #allocation1 [shape = 'u32[72,128]{1,0:T(1,128)}', space=vmem, size = 0x9000, scoped, tag = 'internal scratch']
  %s0 = inlined_call_operand.vmem [shape: f32[4,256], index: 0, kind: input, shape index: {}]
  %s1 = inlined_call_operand.vmem [shape: f32[256,49], index: 1, kind: input, shape index: {}]
  %s2 = inlined_call_operand.vmem [shape: f32[49,256], index: 2, kind: input, shape index: {}]
  %s3 = inlined_call_operand.vmem [shape: f32[1,49], index: 3, kind: input, shape index: {}]
  %s4 = inlined_call_operand.hbm [shape: f32[4,49], index: 4, kind: output, shape index: {0}]
  %s5 = inlined_call_operand.hbm [shape: f32[4,49], index: 5, kind: output, shape index: {1}]
  %6 = xla_tuple %s4, %s5
  %s7 = sld [smem:[#allocation0]]
  $region34: #{tpu_custom_call.1} parent=0
    _
  %s9 = ssub.s32 1, %s7
  %s10 = scalar_select 0, %s9, %s7
  $region1: #{tpu_custom_call.1} parent=0
    #allocation2 [shape = 'u8[2048]{0}', space=vmem, size = 0x800, scoped, tag = 'output window, operand 0, single buffered']
    #allocation3 [shape = 's32[1]{0}', space=sflag, size = 0x4, scoped, tag = 'scoped memory for tpu_custom_call.1']
    #allocation4 [shape = 'u8[2048]{0}', space=vmem, size = 0x800, scoped, tag = 'output window, operand 1, single buffered']
    #allocation5 [shape = 's32[1]{0}', space=sflag, size = 0x4, scoped, tag = 'scoped memory for tpu_custom_call.1']
    %11 = vsyncpa [#allocation3], 0
    %12 = vsyncpa [#allocation5], 0
    // Predicated region
    $region2: #{tpu_custom_call.1} parent=1 // pred_check
      _
    $region3: #{tpu_custom_call.1} parent=1 // pred_check_branch
      %14 = sbr.rel (0) target = $region5
    $region4: #{tpu_custom_call.1} parent=1 // pred_region
      _
    $region5: #{tpu_custom_call.1} parent=1 // pred_fallthru
      _
    // Predicated region
    $region6: #{tpu_custom_call.1} parent=1 // pred_check
      _
    $region7: #{tpu_custom_call.1} parent=1 // pred_check_branch
      %16 = sbr.rel (0) target = $region9
    $region8: #{tpu_custom_call.1} parent=1 // pred_region
      _
    $region9: #{tpu_custom_call.1} parent=1 // pred_fallthru
      _
    // Predicated region
    $region10: #{tpu_custom_call.1} parent=1 // pred_check
      _
    $region11: #{tpu_custom_call.1} parent=1 // pred_check_branch
      %18 = sbr.rel (0) target = $region13
    $region12: #{tpu_custom_call.1} parent=1 // pred_region
      _
    $region13: #{tpu_custom_call.1} parent=1 // pred_fallthru
      _
    // Predicated region
    $region14: #{tpu_custom_call.1} parent=1 // pred_check
      _
    $region15: #{tpu_custom_call.1} parent=1 // pred_check_branch
      %20 = sbr.rel (0) target = $region17
    $region16: #{tpu_custom_call.1} parent=1 // pred_region
      _
    $region17: #{tpu_custom_call.1} parent=1 // pred_fallthru
      _
    %v21 = vld [vmem:[%s0] sm:$0xff]
    %v22 = vld [vmem:[%s1] sm:$0xff]
    %v23 = vld [vmem:[%s1 + $0x8] sm:$0xff]
    %v24 = vld [vmem:[%s1 + $0x10] sm:$0xff]
    %v25 = vld [vmem:[%s1 + $0x18] sm:$0xff]
    %v26 = vld [vmem:[%s1 + $0x20] sm:$0xff]
    %v27 = vld [vmem:[%s1 + $0x28] sm:$0xff]
    %v28 = vld [vmem:[%s1 + $0x30] sm:$0xff]
    %v29 = vld [vmem:[%s1 + $0x38] sm:$0xff]
    %v30 = vld [vmem:[%s1 + $0x40] sm:$0xff]
    %v31 = vld [vmem:[%s1 + $0x48] sm:$0xff]
    %v32 = vld [vmem:[%s1 + $0x50] sm:$0xff]
    %v33 = vld [vmem:[%s1 + $0x58] sm:$0xff]
    %v34 = vld [vmem:[%s1 + $0x60] sm:$0xff]
    %v35 = vld [vmem:[%s1 + $0x68] sm:$0xff]
    %v36 = vld [vmem:[%s1 + $0x70] sm:$0xff]
    %v37 = vld [vmem:[%s1 + $0x78] sm:$0xff]
    %v38 = vld [vmem:[%s1 + $0x80] sm:$0xff]
    %v39 = vld [vmem:[%s1 + $0x88] sm:$0xff]
    %v40 = vld [vmem:[%s1 + $0x90] sm:$0xff]
    %v41 = vld [vmem:[%s1 + $0x98] sm:$0xff]
    %v42 = vld [vmem:[%s1 + $0xa0] sm:$0xff]
    %v43 = vld [vmem:[%s1 + $0xa8] sm:$0xff]
    %v44 = vld [vmem:[%s1 + $0xb0] sm:$0xff]
    %v45 = vld [vmem:[%s1 + $0xb8] sm:$0xff]
    %v46 = vld [vmem:[%s1 + $0xc0] sm:$0xff]
    %v47 = vld [vmem:[%s1 + $0xc8] sm:$0xff]
    %v48 = vld [vmem:[%s1 + $0xd0] sm:$0xff]
    %v49 = vld [vmem:[%s1 + $0xd8] sm:$0xff]
    %v50 = vld [vmem:[%s1 + $0xe0] sm:$0xff]
    %v51 = vld [vmem:[%s1 + $0xe8] sm:$0xff]
    %v52 = vld [vmem:[%s1 + $0xf0] sm:$0xff]
    %v53 = vld [vmem:[%s1 + $0xf8] sm:$0xff]
    %55 = vst [vmem:[#allocation1] ss:$2 sm:$0xff] %v21
    %v56 = vld.sshfl [vmem:[#allocation1] sm:$0xff pattern:$0x75316420]
    %v57 = vld.sshfl [vmem:[#allocation1 + $0x8] sm:$0xff pattern:$0x75316420]
    %60 = vmatpush.msra.mxu0 %v37
    %61 = vmatpush.msra.mxu0 %v36
    %62 = vmatpush.msra.mxu0 %v35
    %63 = vmatpush.msra.mxu0 %v34
    %64 = vmatpush.msra.mxu0 %v33
    %65 = vmatpush.msra.mxu0 %v32
    %66 = vmatpush.msra.mxu0 %v31
    %67 = vmatpush.msra.mxu0 %v30
    %68 = vmatpush.msra.mxu0 %v29
    %69 = vmatpush.msra.mxu0 %v28
    %70 = vmatpush.msra.mxu0 %v27
    %71 = vmatpush.msra.mxu0 %v26
    %72 = vmatpush.msra.mxu0 %v25
    %73 = vmatpush.msra.mxu0 %v24
    %74 = vmatpush.msra.mxu0 %v23
    %75 = vmatpush.msra.mxu0 %v22
    %76 = vmatmul.f32.gmra.mxu0 %v56
    %v77 = vpop.f32.mrf.mxu0
    %v78 = vadd.f32 0.0, %v77
    %79 = vdwg.mxu0
    %80 = vmatpush.msra.mxu0 %v53
    %81 = vmatpush.msra.mxu0 %v52
    %82 = vmatpush.msra.mxu0 %v51
    %83 = vmatpush.msra.mxu0 %v50
    %84 = vmatpush.msra.mxu0 %v49
    %85 = vmatpush.msra.mxu0 %v48
    %86 = vmatpush.msra.mxu0 %v47
    %87 = vmatpush.msra.mxu0 %v46
    %88 = vmatpush.msra.mxu0 %v45
    %89 = vmatpush.msra.mxu0 %v44
    %90 = vmatpush.msra.mxu0 %v43
    %91 = vmatpush.msra.mxu0 %v42
    %92 = vmatpush.msra.mxu0 %v41
    %93 = vmatpush.msra.mxu0 %v40
    %94 = vmatpush.msra.mxu0 %v39
    %95 = vmatpush.msra.mxu0 %v38
    %96 = vmatmul.f32.gmra.mxu0 %v57
    %v97 = vpop.f32.mrf.mxu0
    %v98 = vadd.f32 %v78, %v97
    %99 = vdwg.mxu0
    %vm100 = vcmask 396288
    %101 = vst.msk [vmem:[#allocation2] sm:$0xf] %vm100, %v98
    %v102 = vld [vmem:[%s2] sm:$0xff]
    %v103 = vld [vmem:[%s2 + $0x8] sm:$0xff]
    %v104 = vld [vmem:[%s2 + $0x10] sm:$0xff]
    %v105 = vld [vmem:[%s2 + $0x18] sm:$0xff]
    %v106 = vld [vmem:[%s2 + $0x20] sm:$0xff]
    %v107 = vld [vmem:[%s2 + $0x28] sm:$0xff]
    %v108 = vld [vmem:[%s2 + $0x30] sm:$0xff]
    %v109 = vld [vmem:[%s2 + $0x38] sm:$0xff]
    %v110 = vld [vmem:[%s2 + $0x40] sm:$0xff]
    %v111 = vld [vmem:[%s2 + $0x48] sm:$0xff]
    %v112 = vld [vmem:[%s2 + $0x50] sm:$0xff]
    %v113 = vld [vmem:[%s2 + $0x58] sm:$0xff]
    %v114 = vld [vmem:[%s2 + $0x60] sm:$0x1]
    %v115 = vld [vmem:[%s2 + $0x68] sm:$0x1]
    %vm116 = vcmp.gt.f32.partialorder %v102, 0.5
    %vm117 = vcmp.gt.f32.partialorder %v103, 0.5
    %vm118 = vcmp.gt.f32.partialorder %v104, 0.5
    %vm119 = vcmp.gt.f32.partialorder %v105, 0.5
    %vm120 = vcmp.gt.f32.partialorder %v106, 0.5
    %vm121 = vcmp.gt.f32.partialorder %v107, 0.5
    %vm122 = vcmp.gt.f32.partialorder %v108, 0.5
    %vm123 = vcmp.gt.f32.partialorder %v109, 0.5
    %vm124 = vcmp.gt.f32.partialorder %v110, 0.5
    %vm125 = vcmp.gt.f32.partialorder %v111, 0.5
    %vm126 = vcmp.gt.f32.partialorder %v112, 0.5
    %vm127 = vcmp.gt.f32.partialorder %v113, 0.5
    %vm128 = vcmp.gt.f32.partialorder %v114, 0.5
    %vm129 = vcmp.gt.f32.partialorder %v115, 0.5
    %v130 = vrot.slane %v21, 3
    %vm131 = vcmask 1040384
    %v132 = vsel %vm131, %v21, %v130
    %vm133 = vcmask 1041409
    %v134 = vsel %vm133, %v21, %v130
    %v135 = vrot.slane %v134, 1
    %vm136 = vcmask 1042434
    %v137 = vsel %vm136, %v21, %v130
    %v138 = vrot.slane %v137, 2
    %vm139 = vcmask 1043459
    %v140 = vsel %vm139, %v21, %v130
    %v141 = vrot.slane %v140, 3
    %v142 = vsel %vm116, 1, 0
    %v143 = vsel %vm117, 1, 0
    %v144 = vsel %vm118, 1, 0
    %v145 = vsel %vm119, 1, 0
    %v146 = vsel %vm120, 1, 0
    %v147 = vsel %vm121, 1, 0
    %v148 = vsel %vm122, 1, 0
    %v149 = vsel %vm123, 1, 0
    %v150 = vsel %vm124, 1, 0
    %v151 = vsel %vm125, 1, 0
    %v152 = vsel %vm126, 1, 0
    %v153 = vsel %vm127, 1, 0
    %v154 = vsel %vm128, 1, 0
    %v155 = vsel %vm129, 1, 0
    %vm156 = vcmp.eq.s32.totalorder %v142, 1
    %vm157 = vcmp.eq.s32.totalorder %v143, 1
    %vm158 = vcmp.eq.s32.totalorder %v144, 1
    %vm159 = vcmp.eq.s32.totalorder %v145, 1
    %vm160 = vcmp.eq.s32.totalorder %v146, 1
    %vm161 = vcmp.eq.s32.totalorder %v147, 1
    %vm162 = vcmp.eq.s32.totalorder %v148, 1
    %vm163 = vcmp.eq.s32.totalorder %v149, 1
    %vm164 = vcmp.eq.s32.totalorder %v150, 1
    %vm165 = vcmp.eq.s32.totalorder %v151, 1
    %vm166 = vcmp.eq.s32.totalorder %v152, 1
    %vm167 = vcmp.eq.s32.totalorder %v153, 1
    %vm168 = vcmp.eq.s32.totalorder %v154, 1
    %vm169 = vcmp.eq.s32.totalorder %v155, 1
    %v170 = vperm.slane %v132, 0
    %v171 = vperm.slane %v132, 1
    %v172 = vperm.slane %v135, 0
    %v173 = vperm.slane %v135, 1
    %v174 = vperm.slane %v138, 0
    %v175 = vperm.slane %v138, 1
    %v176 = vperm.slane %v141, 0
    %v177 = vperm.slane %v141, 1
    %v186 = vsel %vm156, %v170, -3.4028235e+38
    %v187 = vsel %vm157, %v171, -3.4028235e+38
    %v188 = vsel %vm158, %v170, -3.4028235e+38
    %v189 = vsel %vm159, %v171, -3.4028235e+38
    %v190 = vsel %vm160, %v170, -3.4028235e+38
    %v191 = vsel %vm161, %v171, -3.4028235e+38
    %v192 = vsel %vm162, %v170, -3.4028235e+38
    %v193 = vsel %vm163, %v171, -3.4028235e+38
    %v194 = vsel %vm164, %v170, -3.4028235e+38
    %v195 = vsel %vm165, %v171, -3.4028235e+38
    %v196 = vsel %vm166, %v170, -3.4028235e+38
    %v197 = vsel %vm167, %v171, -3.4028235e+38
    %v198 = vsel %vm168, %v170, -3.4028235e+38
    %v199 = vsel %vm169, %v171, -3.4028235e+38
    %v200 = vsel %vm156, %v172, -3.4028235e+38
    %v201 = vsel %vm157, %v173, -3.4028235e+38
    %v202 = vsel %vm158, %v172, -3.4028235e+38
    %v203 = vsel %vm159, %v173, -3.4028235e+38
    %v204 = vsel %vm160, %v172, -3.4028235e+38
    %v205 = vsel %vm161, %v173, -3.4028235e+38
    %v206 = vsel %vm162, %v172, -3.4028235e+38
    %v207 = vsel %vm163, %v173, -3.4028235e+38
    %v208 = vsel %vm164, %v172, -3.4028235e+38
    %v209 = vsel %vm165, %v173, -3.4028235e+38
    %v210 = vsel %vm166, %v172, -3.4028235e+38
    %v211 = vsel %vm167, %v173, -3.4028235e+38
    %v212 = vsel %vm168, %v172, -3.4028235e+38
    %v213 = vsel %vm169, %v173, -3.4028235e+38
    %v214 = vsel %vm156, %v174, -3.4028235e+38
    %v215 = vsel %vm157, %v175, -3.4028235e+38
    %v216 = vsel %vm158, %v174, -3.4028235e+38
    %v217 = vsel %vm159, %v175, -3.4028235e+38
    %v218 = vsel %vm160, %v174, -3.4028235e+38
    %v219 = vsel %vm161, %v175, -3.4028235e+38
    %v220 = vsel %vm162, %v174, -3.4028235e+38
    %v221 = vsel %vm163, %v175, -3.4028235e+38
    %v222 = vsel %vm164, %v174, -3.4028235e+38
    %v223 = vsel %vm165, %v175, -3.4028235e+38
    %v224 = vsel %vm166, %v174, -3.4028235e+38
    %v225 = vsel %vm167, %v175, -3.4028235e+38
    %v226 = vsel %vm168, %v174, -3.4028235e+38
    %v227 = vsel %vm169, %v175, -3.4028235e+38
    %v228 = vsel %vm156, %v176, -3.4028235e+38
    %v229 = vsel %vm157, %v177, -3.4028235e+38
    %v230 = vsel %vm158, %v176, -3.4028235e+38
    %v231 = vsel %vm159, %v177, -3.4028235e+38
    %v232 = vsel %vm160, %v176, -3.4028235e+38
    %v233 = vsel %vm161, %v177, -3.4028235e+38
    %v234 = vsel %vm162, %v176, -3.4028235e+38
    %v235 = vsel %vm163, %v177, -3.4028235e+38
    %v236 = vsel %vm164, %v176, -3.4028235e+38
    %v237 = vsel %vm165, %v177, -3.4028235e+38
    %v238 = vsel %vm166, %v176, -3.4028235e+38
    %v239 = vsel %vm167, %v177, -3.4028235e+38
    %v240 = vsel %vm168, %v176, -3.4028235e+38
    %v241 = vsel %vm169, %v177, -3.4028235e+38
    %v242 = vmax.f32 %v186, %v187
    %243 = vmax.xlane.f32.xlu0 %v242
    %v244 = vpop.xlane.xlu0 %243
    %v245 = vmax.f32 %v188, %v189
    %246 = vmax.xlane.f32.xlu0 %v245
    %v247 = vpop.xlane.xlu0 %246
    %v248 = vmax.f32 %v190, %v191
    %249 = vmax.xlane.f32.xlu0 %v248
    %v250 = vpop.xlane.xlu0 %249
    %v251 = vmax.f32 %v192, %v193
    %252 = vmax.xlane.f32.xlu0 %v251
    %v253 = vpop.xlane.xlu0 %252
    %v254 = vmax.f32 %v194, %v195
    %255 = vmax.xlane.f32.xlu0 %v254
    %v256 = vpop.xlane.xlu0 %255
    %v257 = vmax.f32 %v196, %v197
    %258 = vmax.xlane.f32.xlu0 %v257
    %v259 = vpop.xlane.xlu0 %258
    %v260 = vsel %vm131, %v198, -inf
    %v261 = vsel %vm131, %v199, -inf
    %v262 = vmax.f32 %v260, %v261
    %263 = vmax.xlane.f32.xlu0 %v262
    %v264 = vpop.xlane.xlu0 %263
    %v265 = vmax.f32 %v200, %v201
    %266 = vmax.xlane.f32.xlu0 %v265
    %v267 = vpop.xlane.xlu0 %266
    %v268 = vmax.f32 %v202, %v203
    %269 = vmax.xlane.f32.xlu0 %v268
    %v270 = vpop.xlane.xlu0 %269
    %v271 = vmax.f32 %v204, %v205
    %272 = vmax.xlane.f32.xlu0 %v271
    %v273 = vpop.xlane.xlu0 %272
    %v274 = vmax.f32 %v206, %v207
    %275 = vmax.xlane.f32.xlu0 %v274
    %v276 = vpop.xlane.xlu0 %275
    %v277 = vmax.f32 %v208, %v209
    %278 = vmax.xlane.f32.xlu0 %v277
    %v279 = vpop.xlane.xlu0 %278
    %v280 = vmax.f32 %v210, %v211
    %281 = vmax.xlane.f32.xlu0 %v280
    %v282 = vpop.xlane.xlu0 %281
    %v283 = vsel %vm131, %v212, -inf
    %v284 = vsel %vm131, %v213, -inf
    %v285 = vmax.f32 %v283, %v284
    %286 = vmax.xlane.f32.xlu0 %v285
    %v287 = vpop.xlane.xlu0 %286
    %v288 = vmax.f32 %v214, %v215
    %289 = vmax.xlane.f32.xlu0 %v288
    %v290 = vpop.xlane.xlu0 %289
    %v291 = vmax.f32 %v216, %v217
    %292 = vmax.xlane.f32.xlu0 %v291
    %v293 = vpop.xlane.xlu0 %292
    %v294 = vmax.f32 %v218, %v219
    %295 = vmax.xlane.f32.xlu0 %v294
    %v296 = vpop.xlane.xlu0 %295
    %v297 = vmax.f32 %v220, %v221
    %298 = vmax.xlane.f32.xlu0 %v297
    %v299 = vpop.xlane.xlu0 %298
    %v300 = vmax.f32 %v222, %v223
    %301 = vmax.xlane.f32.xlu0 %v300
    %v302 = vpop.xlane.xlu0 %301
    %v303 = vmax.f32 %v224, %v225
    %304 = vmax.xlane.f32.xlu0 %v303
    %v305 = vpop.xlane.xlu0 %304
    %v306 = vsel %vm131, %v226, -inf
    %v307 = vsel %vm131, %v227, -inf
    %v308 = vmax.f32 %v306, %v307
    %309 = vmax.xlane.f32.xlu0 %v308
    %v310 = vpop.xlane.xlu0 %309
    %v311 = vmax.f32 %v228, %v229
    %312 = vmax.xlane.f32.xlu0 %v311
    %v313 = vpop.xlane.xlu0 %312
    %v314 = vmax.f32 %v230, %v231
    %315 = vmax.xlane.f32.xlu0 %v314
    %v316 = vpop.xlane.xlu0 %315
    %v317 = vmax.f32 %v232, %v233
    %318 = vmax.xlane.f32.xlu0 %v317
    %v319 = vpop.xlane.xlu0 %318
    %v320 = vmax.f32 %v234, %v235
    %321 = vmax.xlane.f32.xlu0 %v320
    %v322 = vpop.xlane.xlu0 %321
    %v323 = vmax.f32 %v236, %v237
    %324 = vmax.xlane.f32.xlu0 %v323
    %v325 = vpop.xlane.xlu0 %324
    %v326 = vmax.f32 %v238, %v239
    %327 = vmax.xlane.f32.xlu0 %v326
    %v328 = vpop.xlane.xlu0 %327
    %v329 = vsel %vm131, %v240, -inf
    %v330 = vsel %vm131, %v241, -inf
    %v331 = vmax.f32 %v329, %v330
    %332 = vmax.xlane.f32.xlu0 %v331
    %v333 = vpop.xlane.xlu0 %332
    %v334 = vld [vmem:[%s3] sm:$0x1]
    %vm335 = vcmp.gt.f32.partialorder %v334, 0.5
    %v336 = vsel %vm335, 1, 0
    %v337 = vperm.slane %v336, 0
    %vm338 = vcmp.eq.s32.totalorder %v337, 1
    %v367 = vlaneseq
    %v368 = vand.u32 %v367, 127
    %v369 = vperm.slane %v244, %v368
    %v370 = vadd.s32 %v368, 4294967288
    %v371 = vperm.slane %v247, %v370
    %vm372 = vcmask 130112
    %v373 = vsel %vm372, %v371, %v369
    %v374 = vadd.s32 %v368, 4294967280
    %v375 = vperm.slane %v250, %v374
    %vm376 = vcmask 195712
    %v377 = vsel %vm376, %v375, %v373
    %v378 = vadd.s32 %v368, 4294967272
    %v379 = vperm.slane %v253, %v378
    %vm380 = vcmask 261312
    %v381 = vsel %vm380, %v379, %v377
    %v382 = vadd.s32 %v368, 4294967264
    %v383 = vperm.slane %v256, %v382
    %vm384 = vcmask 326912
    %v385 = vsel %vm384, %v383, %v381
    %v386 = vadd.s32 %v368, 4294967256
    %v387 = vperm.slane %v259, %v386
    %vm388 = vcmask 392512
    %v389 = vsel %vm388, %v387, %v385
    %v390 = vadd.s32 %v368, 4294967248
    %v391 = vperm.slane %v264, %v390
    %vm392 = vcmask 458112
    %v393 = vsel %vm392, %v391, %v389
    %v394 = vperm.slane %v267, %v368
    %v395 = vperm.slane %v270, %v370
    %v396 = vsel %vm372, %v395, %v394
    %v397 = vperm.slane %v273, %v374
    %v398 = vsel %vm376, %v397, %v396
    %v399 = vperm.slane %v276, %v378
    %v400 = vsel %vm380, %v399, %v398
    %v401 = vperm.slane %v279, %v382
    %v402 = vsel %vm384, %v401, %v400
    %v403 = vperm.slane %v282, %v386
    %v404 = vsel %vm388, %v403, %v402
    %v405 = vperm.slane %v287, %v390
    %v406 = vsel %vm392, %v405, %v404
    %v407 = vperm.slane %v290, %v368
    %v408 = vperm.slane %v293, %v370
    %v409 = vsel %vm372, %v408, %v407
    %v410 = vperm.slane %v296, %v374
    %v411 = vsel %vm376, %v410, %v409
    %v412 = vperm.slane %v299, %v378
    %v413 = vsel %vm380, %v412, %v411
    %v414 = vperm.slane %v302, %v382
    %v415 = vsel %vm384, %v414, %v413
    %v416 = vperm.slane %v305, %v386
    %v417 = vsel %vm388, %v416, %v415
    %v418 = vperm.slane %v310, %v390
    %v419 = vsel %vm392, %v418, %v417
    %v420 = vperm.slane %v313, %v368
    %v421 = vperm.slane %v316, %v370
    %v422 = vsel %vm372, %v421, %v420
    %v423 = vperm.slane %v319, %v374
    %v424 = vsel %vm376, %v423, %v422
    %v425 = vperm.slane %v322, %v378
    %v426 = vsel %vm380, %v425, %v424
    %v427 = vperm.slane %v325, %v382
    %v428 = vsel %vm384, %v427, %v426
    %v429 = vperm.slane %v328, %v386
    %v430 = vsel %vm388, %v429, %v428
    %v431 = vperm.slane %v333, %v390
    %v432 = vsel %vm392, %v431, %v430
    %v433 = vsel %vm133, %v406, %v393
    %v434 = vsel %vm136, %v419, %v433
    %v435 = vsel %vm139, %v432, %v434
    %v437 = vsel %vm338, %v435, 0.0
    %438 = vst.msk [vmem:[#allocation4] sm:$0xf] %vm100, %v437
    // Predicated region
    $region18: #{tpu_custom_call.1} parent=1 // pred_check
      _
    $region19: #{tpu_custom_call.1} parent=1 // pred_check_branch
      %440 = sbr.rel (0) target = $region21
    $region20: #{tpu_custom_call.1} parent=1 // pred_region
      %442 = vsyncadd [#allocation3], 0
      %s444 = sshll.u32 [#allocation2], 4
      %s445 = int_to_ptr.vmem [resolvable:$true] %s444
      %s446 = sshll.u32 %s4, 4
      %s447 = int_to_ptr.hbm [resolvable:$true] %s446
      %449 = dma.vmem_to_hbm [thread:$0]  %s445, 64, %s447, [#allocation3]
    $region21: #{tpu_custom_call.1} parent=1 // pred_fallthru
      _
    // Predicated region
    $region22: #{tpu_custom_call.1} parent=1 // pred_check
      _
    $region23: #{tpu_custom_call.1} parent=1 // pred_check_branch
      %451 = sbr.rel (0) target = $region25
    $region24: #{tpu_custom_call.1} parent=1 // pred_region
      %453 = vsyncadd [#allocation5], 0
      %s455 = sshll.u32 [#allocation4], 4
      %s456 = int_to_ptr.vmem [resolvable:$true] %s455
      %s457 = sshll.u32 %s5, 4
      %s458 = int_to_ptr.hbm [resolvable:$true] %s457
      %460 = dma.vmem_to_hbm [thread:$0]  %s456, 64, %s458, [#allocation5]
    $region25: #{tpu_custom_call.1} parent=1 // pred_fallthru
      _
    // Predicated region
    $region26: #{tpu_custom_call.1} parent=1 // pred_check
      _
    $region27: #{tpu_custom_call.1} parent=1 // pred_check_branch
      %462 = sbr.rel (0) target = $region29
    $region28: #{tpu_custom_call.1} parent=1 // pred_region
      %464 = dma.done [#allocation3], 64
    $region29: #{tpu_custom_call.1} parent=1 // pred_fallthru
      _
    // Predicated region
    $region30: #{tpu_custom_call.1} parent=1 // pred_check
      _
    $region31: #{tpu_custom_call.1} parent=1 // pred_check_branch
      %466 = sbr.rel (0) target = $region33
    $region32: #{tpu_custom_call.1} parent=1 // pred_region
      %468 = dma.done [#allocation5], 64
    $region33: #{tpu_custom_call.1} parent=1 // pred_fallthru
      _
    %469 = vsyncpa [#allocation3], 1
    %470 = vsyncpa [#allocation5], 1

</llo_original>
